<compile_context>
chip_gen: v6e
topology: v6e:2x2x1
jax: 0.10.0
libtpu: 0.0.40
codegen_flags: <defaults>
</compile_context>

<pallas_src>
import functools

import jax
import jax.numpy as jnp
from jax import lax
from jax.experimental import pallas as pl
from jax.experimental.pallas import tpu as pltpu

LANE = 128
SUB = 8


def _round_up(a, b):
    return ((a + b - 1) // b) * b


def _ssa_recon_kernel(u_ref, v_ref, s_ref, o_ref, vs_ref, *,
                      K, L, N, tn_g, tn_reg):
    """Rank-1 reconstruction + anti-diagonal (Hankel) averaging, lane-dense.

    u_ref : (N_pad+L-1, TM) zero-padded left vectors (rows [L-1, L-1+K) = data)
    v_ref : (L, TM)         right vectors
    s_ref : (1, TM)         singular values
    o_ref : (tn_g, TM)      output block (rows [j*tn_g, (j+1)*tn_g))
    vs_ref: (L, TM)         VMEM scratch: v * sigma (computed once per step)
    """
    TM = o_ref.shape[1]

    # Fold sigma into v once per grid step (item: cheap, keeps scaling in-kernel).
    vs_ref[...] = v_ref[...] * s_ref[...]

    j = pl.program_id(1)
    n_base = pl.multiple_of(j * tn_g, tn_g)   # first global output row of block

    # count[n] = #{(k,l): k+l==n, 0<=k<K, 0<=l<L} = min(n+1, L, K, N-n).
    # Exact reciprocal on a (tn_g, 1) vector; clamp >=1 so padded rows (n>=N,
    # whose acc is exactly 0) never produce inf/nan.
    r_idx = lax.broadcasted_iota(jnp.int32, (tn_g, 1), 0)
    n_idx = n_base + r_idx
    count = jnp.minimum(jnp.minimum(n_idx + 1, L), jnp.minimum(K, N - n_idx))
    count = jnp.maximum(count, 1).astype(jnp.float32)
    inv_count = 1.0 / count                              # (tn_g, 1), exact

    # Static loop over register-resident row chunks of the output block.
    for c0 in range(0, tn_g, tn_reg):
        tn = min(tn_reg, tn_g - c0)          # multiple of 8
        base = n_base + c0                   # global output row of this chunk

        def fma(l, a):
            # out[n] += (v*s)[l] * u_big[n + (L-1-l)]   (u_big zero outside data)
            u_win = u_ref[pl.ds(base + (L - 1 - l), tn), :]
            return a + vs_ref[pl.ds(l, 1), :] * u_win

        acc = jnp.zeros((tn, TM), jnp.float32)
        if L <= 32:
            # Fully unrolled: static-relative slice starts, full LLO visibility.
            for l in range(L):
                acc = fma(l, acc)
        else:
            # Partial unroll by 8: dynamic aligned group base + static offsets.
            groups = L // 8

            def group(g, a):
                l0 = pl.multiple_of(g * 8, 8)
                for q in range(8):
                    a = fma(l0 + q, a)
                return a

            acc = lax.fori_loop(0, groups, group, acc)
            for l in range(groups * 8, L):   # static tail
                acc = fma(l, acc)

        # Single store per chunk; (tn,1) reciprocal broadcast in the epilogue.
        o_ref[pl.ds(c0, tn), :] = acc * inv_count[c0:c0 + tn, :]


def ssa_decomposition_forward(x, window_size, n_components=4, row_tile=256):
    """Equivalent of ssa_decomposition.forward; returns (n_components,B,C,N) f32."""
    B, C, N = x.shape
    L = int(window_size)
    K = N - L + 1
    d = int(n_components)
    if not (1 <= L <= N):
        raise ValueError(f"window_size={L} must be in [1, N={N}]")
    if d > min(K, L):
        raise ValueError(f"n_components={d} exceeds rank min(K,L)={min(K, L)}")
    M = d * B * C

    # Trajectory (Hankel) matrix: T[b,c,k,l] = x[b,c,k+l]   (wrapper glue).
    traj = jnp.stack([x[..., k:k + L] for k in range(K)], axis=-2)   # (B,C,K,L)

    # TODO(synk): torch.linalg.svd (batched SVD) has no clean Pallas equivalent;
    # it stays in plain JAX. The reconstruction hot path runs in the Pallas kernel.
    U, sigma, VT = jnp.linalg.svd(traj.astype(jnp.float32), full_matrices=False)
    # U: (B,C,K,r), sigma: (B,C,r), VT: (B,C,r,L), r = min(K,L) >= d

    # Lane-dense (transposed) layout: flattened (component, batch, channel) on lanes.
    u_cols = jnp.moveaxis(U[..., :, :d], -1, 0).reshape(M, K).T.astype(jnp.float32)   # (K, M)
    v_cols = jnp.moveaxis(VT[..., :d, :], -2, 0).reshape(M, L).T.astype(jnp.float32)  # (L, M)
    s_cols = jnp.moveaxis(sigma[..., :d], -1, 0).reshape(1, M).astype(jnp.float32)    # (1, M)

    # ---- lane tiling (TM, multiple of 128; validated) ----
    row_tile = max(LANE, (int(row_tile) // LANE) * LANE)
    Mp = _round_up(M, LANE)
    TM = min(row_tile, Mp)
    if Mp // TM < 2 and Mp >= 2 * LANE:
        # Give the lane axis >= 2 tiles so v7x megacore has work to shard.
        TM = _round_up(Mp // 2, LANE)
    Mp = _round_up(Mp, TM)

    # ---- N tiling (output blocks of tn_g rows, multiple of 8) ----
    N8 = _round_up(N, SUB)
    tn_g = min(N8, 128)
    if (Mp // TM) * ((N8 + tn_g - 1) // tn_g) < 2 and N8 >= 2 * SUB:
        # Small-M workloads: split N into >= 2 blocks so the grid isn't 1.
        tn_g = _round_up((N8 + 1) // 2, SUB)
    N_pad = _round_up(N8, tn_g)
    U_rows = N_pad + L - 1

    # ---- VMEM budget: shrink TM until the double-buffered footprint fits ----
    def footprint(tm):
        rows_in = _round_up(U_rows, SUB) + _round_up(L, SUB) + SUB   # u + v + s
        return 4 * tm * (2 * rows_in + 2 * tn_g + _round_up(L, SUB))
    while footprint(TM) > 12 * 2**20 and TM > LANE:
        TM -= LANE
    Mp = _round_up(_round_up(M, LANE), TM)
    vmem_limit = int(min(48 * 2**20, max(32 * 2**20, 2 * footprint(TM))))

    # Register chunk height: keep acc + u-window comfortably within 64 vregs.
    tn_reg = 32 if TM <= 256 else 16

    # Zero-pad u by L-1 rows on each side so every shift l in [0, L-1] is an
    # in-bounds slice reading exact zeros outside [0, K); padded output rows
    # (n >= N) and padded lanes (>= M) compute exact zeros and are sliced off.
    u_big = jnp.zeros((U_rows, Mp), jnp.float32).at[L - 1:L - 1 + K, :M].set(u_cols)
    v_pad = jnp.zeros((L, Mp), jnp.float32).at[:, :M].set(v_cols)
    s_pad = jnp.zeros((1, Mp), jnp.float32).at[:, :M].set(s_cols)

    kernel = functools.partial(_ssa_recon_kernel, K=K, L=L, N=N,
                               tn_g=tn_g, tn_reg=tn_reg)

    out = pl.pallas_call(
        kernel,
        grid=(Mp // TM, N_pad // tn_g),
        in_specs=[
            pl.BlockSpec((U_rows, TM), lambda i, j: (0, i)),
            pl.BlockSpec((L, TM), lambda i, j: (0, i)),
            pl.BlockSpec((1, TM), lambda i, j: (0, i)),
        ],
        out_specs=pl.BlockSpec((tn_g, TM), lambda i, j: (j, i)),
        out_shape=jax.ShapeDtypeStruct((N_pad, Mp), jnp.float32),
        scratch_shapes=[pltpu.VMEM((L, TM), jnp.float32)],
        compiler_params=pltpu.CompilerParams(
            dimension_semantics=("parallel", "parallel"),
            vmem_limit_bytes=vmem_limit,
        ),
    )(u_big, v_pad, s_pad)

    # Back to (n_components, B, C, N); drop row and lane padding.
    return out[:N, :M].T.reshape(d, B, C, N)


def ssa_reference(x, window_size, n_components=4):
    """Pure-JAX reference mirroring the PyTorch loop semantics."""
    B, C, N = x.shape
    L = window_size
    K = N - L + 1
    traj = jnp.stack([x[..., k:k + L] for k in range(K)], axis=-2)
    U, sigma, VT = jnp.linalg.svd(traj.astype(jnp.float32), full_matrices=False)
    comps = []
    for i in range(n_components):
        Xe = sigma[..., i][..., None, None] * (
            U[..., :, i][..., :, None] * VT[..., i, :][..., None, :])   # (B,C,K,L)
        cols = []
        for n in range(N):
            vals = [Xe[..., k, n - k] for k in range(max(0, n - L + 1), min(K, n + 1))]
            cols.append(sum(vals) / len(vals))
        comps.append(jnp.stack(cols, axis=-1))
    return jnp.stack(comps)


if __name__ == "__main__":
    # Module has no learned parameters; window_size / n_components are config.
    B, C, N = 2, 4, 16
    window_size, n_components = 8, 4

    x = jax.random.normal(jax.random.PRNGKey(0), (B, C, N), dtype=jnp.float32)

    out = ssa_decomposition_forward(x, window_size, n_components)
    out = jax.block_until_ready(out)

    assert out.shape == (n_components, B, C, N)
    ref = ssa_reference(x, window_size, n_components)
    max_err = float(jnp.max(jnp.abs(out - ref)))
    assert jnp.allclose(out, ref, rtol=1e-3, atol=1e-4), f"max_err={max_err}"

    print("KERNEL_OK")
</pallas_src>

<mosaic_0001>
module attributes {stable_mosaic.version = 11 : i64} {
  func.func @_ssa_recon_kernel(%arg0: i32, %arg1: i32, %arg2: memref<23x128xf32, #tpu.memory_space<vmem>>, %arg3: memref<8x128xf32, #tpu.memory_space<vmem>>, %arg4: memref<1x128xf32, #tpu.memory_space<vmem>>, %arg5: memref<8x128xf32, #tpu.memory_space<vmem>>, %arg6: memref<8x128xf32, #tpu.memory_space<vmem>>) attributes {dimension_semantics = [#tpu.dimension_semantics<parallel>, #tpu.dimension_semantics<parallel>], iteration_bounds = array<i64: 1, 2>, scalar_prefetch = 0 : i64, scratch_operands = 1 : i64, tpu.core_type = #tpu.core_type<tc>, window_params = [{transform_indices = @transform_0, window_bounds = array<i64: 23, 128>}, {transform_indices = @transform_1, window_bounds = array<i64: 8, 128>}, {transform_indices = @transform_2, window_bounds = array<i64: 1, 128>}, {transform_indices = @transform_3, window_bounds = array<i64: 8, 128>}]} {
    %c0 = arith.constant 0 : index
    %c0_0 = arith.constant 0 : index
    %0 = vector.load %arg3[%c0, %c0_0] : memref<8x128xf32, #tpu.memory_space<vmem>>, vector<8x128xf32>
    %c0_1 = arith.constant 0 : index
    %c0_2 = arith.constant 0 : index
    %1 = vector.load %arg4[%c0_1, %c0_2] : memref<1x128xf32, #tpu.memory_space<vmem>>, vector<1x128xf32>
    %2 = vector.broadcast %1 : vector<1x128xf32> to vector<8x128xf32>
    %3 = arith.mulf %0, %2 : vector<8x128xf32>
    %c0_3 = arith.constant 0 : index
    %c0_4 = arith.constant 0 : index
    %4 = vector.load %arg6[%c0_3, %c0_4] : memref<8x128xf32, #tpu.memory_space<vmem>>, vector<8x128xf32>
    tpu.vector_store %arg6[%c0_3, %c0_4], %3 {strides = array<i32>} : memref<8x128xf32, #tpu.memory_space<vmem>>, vector<8x128xf32>,
    %c8_i32 = arith.constant 8 : i32
    %5 = arith.muli %arg1, %c8_i32 : i32
    %6 = tpu.assume_multiple %5, 8 : i32
    %7 = tpu.iota {dimensions = array<i32: 0>} : vector<8x1xi32>
    %8 = vector.broadcast %6 : i32 to vector<8x1xi32>
    %9 = arith.addi %8, %7 : vector<8x1xi32>
    %c1_i32 = arith.constant 1 : i32
    %10 = vector.broadcast %c1_i32 : i32 to vector<8x1xi32>
    %11 = arith.addi %9, %10 : vector<8x1xi32>
    %c8_i32_5 = arith.constant 8 : i32
    %12 = vector.broadcast %c8_i32_5 : i32 to vector<8x1xi32>
    %13 = arith.minsi %11, %12 : vector<8x1xi32>
    %c16_i32 = arith.constant 16 : i32
    %14 = vector.broadcast %c16_i32 : i32 to vector<8x1xi32>
    %15 = arith.subi %14, %9 : vector<8x1xi32>
    %c9_i32 = arith.constant 9 : i32
    %16 = vector.broadcast %c9_i32 : i32 to vector<8x1xi32>
    %17 = arith.minsi %16, %15 : vector<8x1xi32>
    %18 = arith.minsi %13, %17 : vector<8x1xi32>
    %c1_i32_6 = arith.constant 1 : i32
    %19 = vector.broadcast %c1_i32_6 : i32 to vector<8x1xi32>
    %20 = arith.maxsi %18, %19 : vector<8x1xi32>
    %21 = arith.sitofp %20 : vector<8x1xi32> to vector<8x1xf32>
    %cst = arith.constant 1.000000e+00 : f32
    %22 = vector.broadcast %cst : f32 to vector<8x1xf32>
    %23 = arith.divf %22, %21 : vector<8x1xf32>
    %c0_i32 = arith.constant 0 : i32
    %24 = arith.addi %6, %c0_i32 : i32
    %cst_7 = arith.constant 0.000000e+00 : f32
    %25 = vector.broadcast %cst_7 : f32 to vector<8x128xf32>
    %c7_i32 = arith.constant 7 : i32
    %26 = arith.addi %24, %c7_i32 : i32
    %27 = arith.index_cast %26 : i32 to index
    %c0_8 = arith.constant 0 : index
    %28 = vector.load %arg2[%27, %c0_8] : memref<23x128xf32, #tpu.memory_space<vmem>>, vector<8x128xf32>
    %c0_9 = arith.constant 0 : index
    %c0_10 = arith.constant 0 : index
    %29 = vector.load %arg6[%c0_9, %c0_10] : memref<8x128xf32, #tpu.memory_space<vmem>>, vector<1x128xf32>
    %30 = vector.broadcast %29 : vector<1x128xf32> to vector<8x128xf32>
    %31 = arith.mulf %30, %28 : vector<8x128xf32>
    %32 = arith.addf %25, %31 : vector<8x128xf32>
    %c6_i32 = arith.constant 6 : i32
    %33 = arith.addi %24, %c6_i32 : i32
    %34 = arith.index_cast %33 : i32 to index
    %c0_11 = arith.constant 0 : index
    %35 = vector.load %arg2[%34, %c0_11] : memref<23x128xf32, #tpu.memory_space<vmem>>, vector<8x128xf32>
    %c1 = arith.constant 1 : index
    %c0_12 = arith.constant 0 : index
    %36 = vector.load %arg6[%c1, %c0_12] : memref<8x128xf32, #tpu.memory_space<vmem>>, vector<1x128xf32>
    %37 = vector.broadcast %36 : vector<1x128xf32> to vector<8x128xf32>
    %38 = arith.mulf %37, %35 : vector<8x128xf32>
    %39 = arith.addf %32, %38 : vector<8x128xf32>
    %c5_i32 = arith.constant 5 : i32
    %40 = arith.addi %24, %c5_i32 : i32
    %41 = arith.index_cast %40 : i32 to index
    %c0_13 = arith.constant 0 : index
    %42 = vector.load %arg2[%41, %c0_13] : memref<23x128xf32, #tpu.memory_space<vmem>>, vector<8x128xf32>
    %c2 = arith.constant 2 : index
    %c0_14 = arith.constant 0 : index
    %43 = vector.load %arg6[%c2, %c0_14] : memref<8x128xf32, #tpu.memory_space<vmem>>, vector<1x128xf32>
    %44 = vector.broadcast %43 : vector<1x128xf32> to vector<8x128xf32>
    %45 = arith.mulf %44, %42 : vector<8x128xf32>
    %46 = arith.addf %39, %45 : vector<8x128xf32>
    %c4_i32 = arith.constant 4 : i32
    %47 = arith.addi %24, %c4_i32 : i32
    %48 = arith.index_cast %47 : i32 to index
    %c0_15 = arith.constant 0 : index
    %49 = vector.load %arg2[%48, %c0_15] : memref<23x128xf32, #tpu.memory_space<vmem>>, vector<8x128xf32>
    %c3 = arith.constant 3 : index
    %c0_16 = arith.constant 0 : index
    %50 = vector.load %arg6[%c3, %c0_16] : memref<8x128xf32, #tpu.memory_space<vmem>>, vector<1x128xf32>
    %51 = vector.broadcast %50 : vector<1x128xf32> to vector<8x128xf32>
    %52 = arith.mulf %51, %49 : vector<8x128xf32>
    %53 = arith.addf %46, %52 : vector<8x128xf32>
    %c3_i32 = arith.constant 3 : i32
    %54 = arith.addi %24, %c3_i32 : i32
    %55 = arith.index_cast %54 : i32 to index
    %c0_17 = arith.constant 0 : index
    %56 = vector.load %arg2[%55, %c0_17] : memref<23x128xf32, #tpu.memory_space<vmem>>, vector<8x128xf32>
    %c4 = arith.constant 4 : index
    %c0_18 = arith.constant 0 : index
    %57 = vector.load %arg6[%c4, %c0_18] : memref<8x128xf32, #tpu.memory_space<vmem>>, vector<1x128xf32>
    %58 = vector.broadcast %57 : vector<1x128xf32> to vector<8x128xf32>
    %59 = arith.mulf %58, %56 : vector<8x128xf32>
    %60 = arith.addf %53, %59 : vector<8x128xf32>
    %c2_i32 = arith.constant 2 : i32
    %61 = arith.addi %24, %c2_i32 : i32
    %62 = arith.index_cast %61 : i32 to index
    %c0_19 = arith.constant 0 : index
    %63 = vector.load %arg2[%62, %c0_19] : memref<23x128xf32, #tpu.memory_space<vmem>>, vector<8x128xf32>
    %c5 = arith.constant 5 : index
    %c0_20 = arith.constant 0 : index
    %64 = vector.load %arg6[%c5, %c0_20] : memref<8x128xf32, #tpu.memory_space<vmem>>, vector<1x128xf32>
    %65 = vector.broadcast %64 : vector<1x128xf32> to vector<8x128xf32>
    %66 = arith.mulf %65, %63 : vector<8x128xf32>
    %67 = arith.addf %60, %66 : vector<8x128xf32>
    %c1_i32_21 = arith.constant 1 : i32
    %68 = arith.addi %24, %c1_i32_21 : i32
    %69 = arith.index_cast %68 : i32 to index
    %c0_22 = arith.constant 0 : index
    %70 = vector.load %arg2[%69, %c0_22] : memref<23x128xf32, #tpu.memory_space<vmem>>, vector<8x128xf32>
    %c6 = arith.constant 6 : index
    %c0_23 = arith.constant 0 : index
    %71 = vector.load %arg6[%c6, %c0_23] : memref<8x128xf32, #tpu.memory_space<vmem>>, vector<1x128xf32>
    %72 = vector.broadcast %71 : vector<1x128xf32> to vector<8x128xf32>
    %73 = arith.mulf %72, %70 : vector<8x128xf32>
    %74 = arith.addf %67, %73 : vector<8x128xf32>
    %c0_i32_24 = arith.constant 0 : i32
    %75 = arith.addi %24, %c0_i32_24 : i32
    %76 = arith.index_cast %75 : i32 to index
    %c0_25 = arith.constant 0 : index
    %77 = vector.load %arg2[%76, %c0_25] : memref<23x128xf32, #tpu.memory_space<vmem>>, vector<8x128xf32>
    %c7 = arith.constant 7 : index
    %c0_26 = arith.constant 0 : index
    %78 = vector.load %arg6[%c7, %c0_26] : memref<8x128xf32, #tpu.memory_space<vmem>>, vector<1x128xf32>
    %79 = vector.broadcast %78 : vector<1x128xf32> to vector<8x128xf32>
    %80 = arith.mulf %79, %77 : vector<8x128xf32>
    %81 = arith.addf %74, %80 : vector<8x128xf32>
    %82 = vector.broadcast %23 : vector<8x1xf32> to vector<8x128xf32>
    %83 = arith.mulf %81, %82 : vector<8x128xf32>
    %c0_27 = arith.constant 0 : index
    %c0_28 = arith.constant 0 : index
    %84 = vector.load %arg5[%c0_27, %c0_28] : memref<8x128xf32, #tpu.memory_space<vmem>>, vector<8x128xf32>
    tpu.vector_store %arg5[%c0_27, %c0_28], %83 {strides = array<i32>} : memref<8x128xf32, #tpu.memory_space<vmem>>, vector<8x128xf32>,
    return
  }
  func.func @transform_0(%arg0: i32, %arg1: i32) -> (i32, i32) {
    %c0_i32 = arith.constant 0 : i32
    %c0_i32_0 = arith.constant 0 : i32
    return %c0_i32, %arg0 : i32, i32
  }
  func.func @transform_1(%arg0: i32, %arg1: i32) -> (i32, i32) {
    %c0_i32 = arith.constant 0 : i32
    %c0_i32_0 = arith.constant 0 : i32
    return %c0_i32, %arg0 : i32, i32
  }
  func.func @transform_2(%arg0: i32, %arg1: i32) -> (i32, i32) {
    %c0_i32 = arith.constant 0 : i32
    %c0_i32_0 = arith.constant 0 : i32
    return %c0_i32, %arg0 : i32, i32
  }
  func.func @transform_3(%arg0: i32, %arg1: i32) -> (i32, i32) {
    %c0_i32 = arith.constant 0 : i32
    return %arg1, %arg0 : i32, i32
  }
}

</mosaic_0001>

<llo_original>
// kernel: tpu_custom_call.1
$region0: #{tpu_custom_call.1}
  #allocation0 [shape = 'u32[]', space=smem, size = 0x4, offset = 0x4, fixed_abs, tag = 'smem constant byte address 0x4 - core index']
  #allocation1 [shape = 'u32[144,128]{1,0:T(1,128)}', space=vmem, size = 0x12000, scoped, tag = 'internal scratch']
  #allocation2 [shape = 'f32[8,128]{1,0:T(8,128)}', space=vmem, size = 0x1000, scoped, tag = 'scratch operand']
  %s0 = inlined_call_operand.hbm [shape: f32[23,128], index: 0, kind: input, shape index: {}]
  %s1 = inlined_call_operand.hbm [shape: f32[8,128], index: 1, kind: input, shape index: {}]
  %s2 = inlined_call_operand.vmem [shape: f32[1,128], index: 2, kind: input, shape index: {}]
  %s3 = inlined_call_operand.hbm [shape: f32[16,128], index: 3, kind: output, shape index: {}]
  %s4 = sld [smem:[#allocation0]]
  $region53: #{tpu_custom_call.1} parent=0
    _
  %s6 = ssub.s32 1, %s4
  %s7 = scalar_select 0, %s6, %s4
  $region1: #{tpu_custom_call.1} parent=0
    #allocation3 [shape = 'u8[12288]{0}', space=vmem, size = 0x3000, scoped, tag = 'input window, operand 0, single buffered']
    #allocation4 [shape = 's32[2]{0}', space=sflag, size = 0x8, scoped, tag = 'scoped memory for tpu_custom_call.1']
    #allocation5 [shape = 's32[2]{0}', space=sflag, size = 0x8, scoped, tag = 'scoped memory for tpu_custom_call.1']
    #allocation6 [shape = 'u8[4096]{0}', space=vmem, size = 0x1000, scoped, tag = 'input window, operand 1, single buffered']
    #allocation7 [shape = 's32[1]{0}', space=sflag, size = 0x4, scoped, tag = 'scoped memory for tpu_custom_call.1']
    #allocation8 [shape = 'u8[8192]{0}', space=vmem, size = 0x2000, scoped, tag = 'output window, operand 0']
    %8 = vsyncpa [#allocation4], 0
    %9 = vsyncpa [#allocation7], 0
    %10 = vsyncpa [#allocation5], 0
    %s11 = scalar_lea.sflag [#allocation5], 1
    %12 = vsyncpa %s11, 0
    loop: start=0, step=1, limit=4
    $region2: #{tpu_custom_call.1} parent=1 // loop_pre_header
      _
    $region3: #{tpu_custom_call.1} parent=1 // loop_header
      %s14 = sphi 0, %s18
      %p15 = scmp.ge.s32.totalorder %s14, 4
      %s21 = sphi 0, %s33
      %s22 = sphi 0, %s29
      %s23 = sphi 0, %s21
      %s24 = sphi 0, %s22
      %s25 = sphi 0, %s23
      %s26 = sphi 0, %s24
      %s36 = sphi 0, %s38
      %s39 = sphi 0, %s36
      %s40 = sphi 0, %s39
      %s56 = sphi 0, %s40
      %s62 = sphi 0, %s64
      %s65 = sphi 0, %s62
      %s66 = sphi 0, %s65
      %s82 = sphi 0, %s66
      %s88 = sphi 0, %s90
      %s91 = sphi 0, %s88
      %s92 = sphi 0, %s91
      %s108 = sphi 0, %s92
      %s116 = sphi 0, %s118
      %s119 = sphi 0, %s116
      %s120 = sphi 0, %s119
      %s136 = sphi 0, %s120
    $region4: #{tpu_custom_call.1} parent=1 // loop_header_branch
      %17 = sbr.rel (%p15) target = $region8
    $region5: #{tpu_custom_call.1} parent=1 // loop_body
      %s19 = ssub.s32 %s14, 1
      %s20 = ssub.s32 %s14, 2
      %s27 = sadd.s32 1, %s22
      %p28 = scmp.ge.s32.totalorder %s27, 2
      %s29 = scalar_select %p28, 0, %s27
      %s30 = sadd.s32 1, %s21
      %s31 = scalar_select %p28, %s30, %s21
      %p32 = scmp.ge.s32.totalorder %s31, 1
      %s33 = scalar_select %p32, 0, %s31
      %s34 = ssub.s32 %s21, %s33
      %p35 = scmp.eq.s32.totalorder %s34, 0
      %s37 = sadd.s32 %s36, 1
      %s38 = scalar_select %p35, %s36, %s37
      %p41 = pneg %p35
      %p42 = scmp.eq.s32.totalorder %s14, 1
      %p43 = por %p41, %p42
      %p44 = scmp.ne.s32.totalorder %s36, %s39
      %p45 = scmp.eq.s32.totalorder %s14, 0
      %p46 = por %p44, %p45
      %p47 = scmp.ne.s32.totalorder %s36, %s39
      %p48 = scmp.eq.s32.totalorder %s19, 1
      %p49 = por %p47, %p48
      %p50 = scmp.ne.s32.totalorder %s39, %s40
      %p51 = scmp.eq.s32.totalorder %s19, 0
      %p52 = por %p50, %p51
      %p53 = scmp.ne.s32.totalorder %s39, %s40
      %p54 = scmp.eq.s32.totalorder %s20, 1
      %p55 = por %p53, %p54
      %p57 = scmp.ne.s32.totalorder %s40, %s56
      %p58 = scmp.eq.s32.totalorder %s20, 0
      %p59 = por %p57, %p58
      %s60 = ssub.s32 %s21, %s33
      %p61 = scmp.eq.s32.totalorder %s60, 0
      %s63 = sadd.s32 %s62, 1
      %s64 = scalar_select %p61, %s62, %s63
      %p67 = pneg %p61
      %p68 = scmp.eq.s32.totalorder %s14, 1
      %p69 = por %p67, %p68
      %p70 = scmp.ne.s32.totalorder %s62, %s65
      %p71 = scmp.eq.s32.totalorder %s14, 0
      %p72 = por %p70, %p71
      %p73 = scmp.ne.s32.totalorder %s62, %s65
      %p74 = scmp.eq.s32.totalorder %s19, 1
      %p75 = por %p73, %p74
      %p76 = scmp.ne.s32.totalorder %s65, %s66
      %p77 = scmp.eq.s32.totalorder %s19, 0
      %p78 = por %p76, %p77
      %p79 = scmp.ne.s32.totalorder %s65, %s66
      %p80 = scmp.eq.s32.totalorder %s20, 1
      %p81 = por %p79, %p80
      %p83 = scmp.ne.s32.totalorder %s66, %s82
      %p84 = scmp.eq.s32.totalorder %s20, 0
      %p85 = por %p83, %p84
      %s86 = ssub.s32 %s21, %s33
      %p87 = scmp.eq.s32.totalorder %s86, 0
      %s89 = sadd.s32 %s88, 1
      %s90 = scalar_select %p87, %s88, %s89
      %p93 = pneg %p87
      %p94 = scmp.eq.s32.totalorder %s14, 1
      %p95 = por %p93, %p94
      %p96 = scmp.ne.s32.totalorder %s88, %s91
      %p97 = scmp.eq.s32.totalorder %s14, 0
      %p98 = por %p96, %p97
      %p99 = scmp.ne.s32.totalorder %s88, %s91
      %p100 = scmp.eq.s32.totalorder %s19, 1
      %p101 = por %p99, %p100
      %p102 = scmp.ne.s32.totalorder %s91, %s92
      %p103 = scmp.eq.s32.totalorder %s19, 0
      %p104 = por %p102, %p103
      %p105 = scmp.ne.s32.totalorder %s91, %s92
      %p106 = scmp.eq.s32.totalorder %s20, 1
      %p107 = por %p105, %p106
      %p109 = scmp.ne.s32.totalorder %s92, %s108
      %p110 = scmp.eq.s32.totalorder %s20, 0
      %p111 = por %p109, %p110
      %s112 = ssub.s32 %s22, %s29
      %s113 = ssub.s32 %s21, %s33
      %s114 = sor.u32 %s112, %s113
      %p115 = scmp.eq.s32.totalorder %s114, 0
      %s117 = sadd.s32 %s116, 1
      %s118 = scalar_select %p115, %s116, %s117
      %p121 = pneg %p115
      %p122 = scmp.eq.s32.totalorder %s14, 1
      %p123 = por %p121, %p122
      %p124 = scmp.ne.s32.totalorder %s116, %s119
      %p125 = scmp.eq.s32.totalorder %s14, 0
      %p126 = por %p124, %p125
      %p127 = scmp.ne.s32.totalorder %s116, %s119
      %p128 = scmp.eq.s32.totalorder %s19, 1
      %p129 = por %p127, %p128
      %p130 = scmp.ne.s32.totalorder %s119, %s120
      %p131 = scmp.eq.s32.totalorder %s19, 0
      %p132 = por %p130, %p131
      %p133 = scmp.ne.s32.totalorder %s119, %s120
      %p134 = scmp.eq.s32.totalorder %s20, 1
      %p135 = por %p133, %p134
      %p137 = scmp.ne.s32.totalorder %s120, %s136
      %p138 = scmp.eq.s32.totalorder %s20, 0
      %p139 = por %p137, %p138
      %p140 = scmp.le.s32.totalorder 1, %s14
      %p141 = scmp.lt.s32.totalorder %s14, 3
      %p142 = pnand %p140, %p141
      %p143 = pneg %p142
      // Predicated region
      $region9: #{tpu_custom_call.1} parent=5 // pred_check
        _
      $region10: #{tpu_custom_call.1} parent=5 // pred_check_branch
        %145 = sbr.rel (%p142) target = $region12
      $region11: #{tpu_custom_call.1} parent=5 // pred_region
        %s146 = ssub.s32 %s14, 1
        // Predicated region
        $region13: #{tpu_custom_call.1} parent=11 // pred_check
          %p147 = pneg %p52
        $region14: #{tpu_custom_call.1} parent=11 // pred_check_branch
          %149 = sbr.rel (%p147) target = $region16
        $region15: #{tpu_custom_call.1} parent=11 // pred_region
          %s151 = ssub.s32 384, 384
          %152 = vsyncadd [#allocation4], %s151
          %s153 = smul.addr %s23, 128
          %s154 = scalar_lea.hbm %s0, %s153
          %s155 = sshll.u32 [#allocation3], 4
          %s156 = int_to_ptr.vmem [resolvable:$true] %s155
          %161 = dma.hbm_to_vmem [thread:$0]  %s154, 384, %s156, [#allocation4], 128, 128, 8
        $region16: #{tpu_custom_call.1} parent=11 // pred_fallthru
          _
        // Predicated region
        $region17: #{tpu_custom_call.1} parent=11 // pred_check
          %p162 = pneg %p78
        $region18: #{tpu_custom_call.1} parent=11 // pred_check_branch
          %164 = sbr.rel (%p162) target = $region20
        $region19: #{tpu_custom_call.1} parent=11 // pred_region
          %s166 = ssub.s32 128, 128
          %167 = vsyncadd [#allocation7], %s166
          %s168 = smul.addr %s23, 128
          %s169 = scalar_lea.hbm %s1, %s168
          %s171 = sshll.u32 [#allocation6], 4
          %s172 = int_to_ptr.vmem [resolvable:$true] %s171
          %174 = dma.hbm_to_vmem [thread:$0]  %s169, 128, %s172, [#allocation7]
        $region20: #{tpu_custom_call.1} parent=11 // pred_fallthru
          _
        // Predicated region
        $region21: #{tpu_custom_call.1} parent=11 // pred_check
          %p175 = pneg %p104
        $region22: #{tpu_custom_call.1} parent=11 // pred_check_branch
          %177 = sbr.rel (%p175) target = $region24
        $region23: #{tpu_custom_call.1} parent=11 // pred_region
          %p178 = scmp.lt.s32.totalorder %s23, 0
          %s179 = scalar_select %p178, %s23, 0
          %s180 = scalar_lea.vmem %s2, %s179
        $region24: #{tpu_custom_call.1} parent=11 // pred_fallthru
          _
      $region12: #{tpu_custom_call.1} parent=5 // pred_fallthru
        _
      %p181 = scmp.lt.s32.totalorder %s14, 2
      // Predicated region
      $region25: #{tpu_custom_call.1} parent=5 // pred_check
        %p182 = pneg %p181
      $region26: #{tpu_custom_call.1} parent=5 // pred_check_branch
        %184 = sbr.rel (%p182) target = $region28
      $region27: #{tpu_custom_call.1} parent=5 // pred_region
        _
      $region28: #{tpu_custom_call.1} parent=5 // pred_fallthru
        _
      %p185 = scmp.le.s32.totalorder 1, %s14
      %p186 = scmp.lt.s32.totalorder %s14, 3
      %p187 = pnand %p185, %p186
      %p188 = pneg %p187
      // Predicated region
      $region29: #{tpu_custom_call.1} parent=5 // pred_check
        _
      $region30: #{tpu_custom_call.1} parent=5 // pred_check_branch
        %190 = sbr.rel (%p187) target = $region32
      $region31: #{tpu_custom_call.1} parent=5 // pred_region
        %s191 = ssub.s32 %s14, 1
        // Predicated region
        $region33: #{tpu_custom_call.1} parent=31 // pred_check
          %p192 = pneg %p52
        $region34: #{tpu_custom_call.1} parent=31 // pred_check_branch
          %194 = sbr.rel (%p192) target = $region36
        $region35: #{tpu_custom_call.1} parent=31 // pred_region
          %195 = dma.done [#allocation4], 384
        $region36: #{tpu_custom_call.1} parent=31 // pred_fallthru
          _
        // Predicated region
        $region37: #{tpu_custom_call.1} parent=31 // pred_check
          %p196 = pneg %p78
        $region38: #{tpu_custom_call.1} parent=31 // pred_check_branch
          %198 = sbr.rel (%p196) target = $region40
        $region39: #{tpu_custom_call.1} parent=31 // pred_region
          %199 = dma.done [#allocation7], 128
        $region40: #{tpu_custom_call.1} parent=31 // pred_fallthru
          _
        %p200 = pneg %p52
        %p201 = pneg %p49
        %p202 = pneg %p78
        %p203 = pneg %p75
        %p204 = scmp.lt.s32.totalorder %s23, 0
        %s205 = scalar_select %p204, %s23, 0
        %s206 = scalar_lea.vmem %s2, %s205
        %p207 = pneg %p104
        %p208 = pneg %p101
        %p209 = pneg %p132
        %p210 = pneg %p129
        %s211 = sand.u32 %s119, 1
        %s212 = scalar_lea.sflag [#allocation5], %s211
        %s213 = sand.u32 %s119, 1
        %s214 = smul.addr %s213, 8
        %s215 = scalar_lea.vmem [#allocation8], %s214
        %p216 = scmp.lt.s32.totalorder %s23, 0
        %s217 = scalar_select %p216, %s23, 0
        %s218 = scalar_lea.vmem %s2, %s217
        %v219 = vld [vmem:[#allocation6] sm:$0xff]
        %v220 = vld [vmem:[%s218] sm:$0x1]
        %v222 = vlaneseq
        %v223 = vshrl.u32 %v222, 7
        %v224 = vsub.s32 0, %v223
        %v225 = vrot.slane %v220, %v224
        %v227 = vmul.f32 %v219, %v225
        %228 = vst [vmem:[#allocation2] sm:$0xff] %v227
        %s229 = smul.u32 %s24, 8
        %v230 = vlaneseq
        %v231 = vshrl.u32 %v230, 7
        %v232 = vstv %s229
        %v233 = vadd.s32 %v232, %v231
        %v234 = vadd.s32 %v233, 1
        %vm235 = vcmp.lt.s32.totalorder %v234, 8
        %v236 = vsel %vm235, %v234, 8
        %v237 = vsub.s32 16, %v233
        %vm238 = vcmp.lt.s32.totalorder %v237, 9
        %v239 = vsel %vm238, %v237, 9
        %vm240 = vcmp.lt.s32.totalorder %v236, %v239
        %v241 = vsel %vm240, %v236, %v239
        %vm242 = vcmp.gt.s32.totalorder %v241, 1
        %v243 = vsel %vm242, %v241, 1
        %v244 = vcvt.s32.f32 %v243
        %v245 = vrcp.pop %v244
        %v246 = vmul.f32 1.0, %v245
        %s247 = sadd.s32 %s229, 7
        %s248 = scalar_lea.vmem [#allocation3], %s247
        %v249 = vld [vmem:[%s248] sm:$0xff]
        %v250 = vld [vmem:[#allocation2] sm:$0x1]
        %v251 = vlaneseq
        %v252 = vshrl.u32 %v251, 7
        %v253 = vsub.s32 0, %v252
        %v254 = vrot.slane %v250, %v253
        %v255 = vmul.f32 %v254, %v249
        %v256 = vadd.f32 %v255, 0.0
        %s257 = sadd.s32 %s229, 6
        %s258 = scalar_lea.vmem [#allocation3], %s257
        %v259 = vld [vmem:[%s258] sm:$0xff]
        %v260 = vld [vmem:[#allocation2 + $0x1] sm:$0x1]
        %v261 = vlaneseq
        %v262 = vshrl.u32 %v261, 7
        %v263 = vsub.s32 0, %v262
        %v264 = vrot.slane %v260, %v263
        %v265 = vmul.f32 %v264, %v259
        %v266 = vadd.f32 %v256, %v265
        %s267 = sadd.s32 %s229, 5
        %s268 = scalar_lea.vmem [#allocation3], %s267
        %v269 = vld [vmem:[%s268] sm:$0xff]
        %v270 = vld [vmem:[#allocation2 + $0x2] sm:$0x1]
        %v271 = vlaneseq
        %v272 = vshrl.u32 %v271, 7
        %v273 = vsub.s32 0, %v272
        %v274 = vrot.slane %v270, %v273
        %v275 = vmul.f32 %v274, %v269
        %v276 = vadd.f32 %v266, %v275
        %s277 = sadd.s32 %s229, 4
        %s278 = scalar_lea.vmem [#allocation3], %s277
        %v279 = vld [vmem:[%s278] sm:$0xff]
        %v280 = vld [vmem:[#allocation2 + $0x3] sm:$0x1]
        %v281 = vlaneseq
        %v282 = vshrl.u32 %v281, 7
        %v283 = vsub.s32 0, %v282
        %v284 = vrot.slane %v280, %v283
        %v285 = vmul.f32 %v284, %v279
        %v286 = vadd.f32 %v276, %v285
        %s287 = sadd.s32 %s229, 3
        %s288 = scalar_lea.vmem [#allocation3], %s287
        %v289 = vld [vmem:[%s288] sm:$0xff]
        %v290 = vld [vmem:[#allocation2 + $0x4] sm:$0x1]
        %v291 = vlaneseq
        %v292 = vshrl.u32 %v291, 7
        %v293 = vsub.s32 0, %v292
        %v294 = vrot.slane %v290, %v293
        %v295 = vmul.f32 %v294, %v289
        %v296 = vadd.f32 %v286, %v295
        %s297 = sadd.s32 %s229, 2
        %s298 = scalar_lea.vmem [#allocation3], %s297
        %v299 = vld [vmem:[%s298] sm:$0xff]
        %v300 = vld [vmem:[#allocation2 + $0x5] sm:$0x1]
        %v301 = vlaneseq
        %v302 = vshrl.u32 %v301, 7
        %v303 = vsub.s32 0, %v302
        %v304 = vrot.slane %v300, %v303
        %v305 = vmul.f32 %v304, %v299
        %v306 = vadd.f32 %v296, %v305
        %s307 = sadd.s32 %s229, 1
        %s308 = scalar_lea.vmem [#allocation3], %s307
        %v309 = vld [vmem:[%s308] sm:$0xff]
        %v310 = vld [vmem:[#allocation2 + $0x6] sm:$0x1]
        %v311 = vlaneseq
        %v312 = vshrl.u32 %v311, 7
        %v313 = vsub.s32 0, %v312
        %v314 = vrot.slane %v310, %v313
        %v315 = vmul.f32 %v314, %v309
        %v316 = vadd.f32 %v306, %v315
        %s317 = scalar_lea.vmem [#allocation3], %s229
        %v318 = vld [vmem:[%s317] sm:$0xff]
        %v319 = vld [vmem:[#allocation2 + $0x7] sm:$0x1]
        %v320 = vlaneseq
        %v321 = vshrl.u32 %v320, 7
        %v322 = vsub.s32 0, %v321
        %v323 = vrot.slane %v319, %v322
        %v324 = vmul.f32 %v323, %v318
        %v325 = vadd.f32 %v316, %v324
        %v326 = vmul.f32 %v325, %v246
        %327 = vst [vmem:[%s215] sm:$0xff] %v326
        %s328 = sand.u32 %s119, 1
        %s329 = scalar_lea.sflag [#allocation5], %s328
        %s330 = sand.u32 %s119, 1
        %s331 = smul.addr %s330, 8
        %s332 = scalar_lea.vmem [#allocation8], %s331
        // Predicated region
        $region41: #{tpu_custom_call.1} parent=31 // pred_check
          %p333 = pneg %p129
        $region42: #{tpu_custom_call.1} parent=31 // pred_check_branch
          %335 = sbr.rel (%p333) target = $region44
        $region43: #{tpu_custom_call.1} parent=31 // pred_region
          %s337 = ssub.s32 128, 128
          %338 = vsyncadd %s329, %s337
          %s339 = sadd.s32 %s23, %s24
          %s340 = smul.addr %s339, 128
          %s341 = scalar_lea.hbm %s3, %s340
          %s343 = sshll.u32 %s332, 4
          %s344 = int_to_ptr.vmem [resolvable:$true] %s343
          %346 = dma.vmem_to_hbm [thread:$0]  %s344, 128, %s341, %s329
        $region44: #{tpu_custom_call.1} parent=31 // pred_fallthru
          _
      $region32: #{tpu_custom_call.1} parent=5 // pred_fallthru
        _
      %p347 = scmp.le.s32.totalorder 2, %s14
      // Predicated region
      $region45: #{tpu_custom_call.1} parent=5 // pred_check
        %p348 = pneg %p347
      $region46: #{tpu_custom_call.1} parent=5 // pred_check_branch
        %350 = sbr.rel (%p348) target = $region48
      $region47: #{tpu_custom_call.1} parent=5 // pred_region
        %s351 = ssub.s32 %s14, 2
        // Predicated region
        $region49: #{tpu_custom_call.1} parent=47 // pred_check
          %p352 = pneg %p135
        $region50: #{tpu_custom_call.1} parent=47 // pred_check_branch
          %354 = sbr.rel (%p352) target = $region52
        $region51: #{tpu_custom_call.1} parent=47 // pred_region
          %s355 = sand.u32 %s120, 1
          %s356 = scalar_lea.sflag [#allocation5], %s355
          %s357 = sand.u32 %s120, 1
          %s358 = smul.addr %s357, 8
          %s359 = scalar_lea.vmem [#allocation8], %s358
          %360 = dma.done %s356, 128
        $region52: #{tpu_custom_call.1} parent=47 // pred_fallthru
          _
      $region48: #{tpu_custom_call.1} parent=5 // pred_fallthru
        _
    $region6: #{tpu_custom_call.1} parent=1 // loop_footer
      %s18 = sadd.s32 1, %s14
    $region7: #{tpu_custom_call.1} parent=1 // loop_footer_branch
      %13 = sbr.rel target = $region3
    $region8: #{tpu_custom_call.1} parent=1 // loop_exit
      _
    %361 = vsyncpa [#allocation4], 1
    %s362 = scalar_lea.sflag [#allocation4], 1
    %363 = vsyncpa %s362, 1
    %364 = vsyncpa [#allocation7], 1
    %365 = vsyncpa [#allocation5], 1
    %s366 = scalar_lea.sflag [#allocation5], 1
    %367 = vsyncpa %s366, 1

</llo_original>
